<compile_context>
chip_gen: v7x
topology: tpu7x:2x2x1
jax: 0.10.0
libtpu: 0.0.40
codegen_flags: <defaults>
</compile_context>

<pallas_src>
import functools
import math

import jax
import jax.numpy as jnp
from jax import lax
from jax.experimental import pallas as pl
from jax.experimental.pallas import tpu as pltpu


# ---------------------------------------------------------------------------
# Kernel
# ---------------------------------------------------------------------------
def _mean_row_norm_kernel(x_ref, o_ref, *, n_rows, tile_rows):
    """Accumulate sum of per-row L2 norms into o_ref; divide by n_rows at end."""
    i = pl.program_id(0)

    @pl.when(i == 0)
    def _init():
        o_ref[...] = jnp.zeros_like(o_ref)

    x = x_ref[...].astype(jnp.float32)                 # upcast in-kernel (bf16 stays bf16 on the DMA)
    sq = jnp.sum(x * x, axis=-1, keepdims=True)        # (tile_rows, 1) lane reduce (XLU)
    norms = jnp.sqrt(sq)                               # EUP
    # Mask rows past the end of the array (ragged last tile of the grid).
    row_ids = i * tile_rows + lax.broadcasted_iota(jnp.int32, (tile_rows, 1), 0)
    norms = jnp.where(row_ids < n_rows, norms, 0.0)
    o_ref[...] = o_ref[...] + jnp.sum(norms)           # sublane reduce + accumulate in output block

    @pl.when(i == pl.num_programs(0) - 1)
    def _finalize():
        o_ref[...] = o_ref[...] * (1.0 / n_rows)


# ---------------------------------------------------------------------------
# Tiling / wrappers
# ---------------------------------------------------------------------------
def _pick_tile_rows(n_rows: int, d: int, itemsize: int, max_tile_rows=None) -> int:
    """Rows per block: ~4 MiB blocks (so 2x double-buffer stays well under the
    default scoped VMEM on v5e/v6e/v7x), aligned to the dtype's sublane packing."""
    target_block_bytes = 4 * 1024 * 1024
    align = max(8, 32 // max(1, itemsize))             # 8 rows f32, 16 bf16, 32 int8
    tile = max(align, (target_block_bytes // max(1, d * itemsize)) // align * align)
    if max_tile_rows is not None:
        tile = max(align, min(tile, (max_tile_rows // align) * align))
    if n_rows <= tile:
        return n_rows                                  # full-extent block is always legal
    return tile


def _mean_row_norm(x2d: jax.Array, max_tile_rows=None) -> jax.Array:
    """mean over rows of ||row||_2 for a (R, D) slab, via a tiled Pallas kernel."""
    n_rows, d = x2d.shape
    itemsize = jnp.dtype(x2d.dtype).itemsize
    tile_rows = _pick_tile_rows(n_rows, d, itemsize, max_tile_rows)
    grid_r = pl.cdiv(n_rows, tile_rows)
    out = pl.pallas_call(
        functools.partial(_mean_row_norm_kernel, n_rows=n_rows, tile_rows=tile_rows),
        out_shape=jax.ShapeDtypeStruct((1, 1), jnp.float32),
        grid=(grid_r,),
        in_specs=[pl.BlockSpec((tile_rows, d), lambda i: (i, 0))],
        out_specs=pl.BlockSpec((1, 1), lambda i: (0, 0)),   # same block every step -> accumulator
        compiler_params=pltpu.CompilerParams(
            dimension_semantics=("arbitrary",)),             # reduction axis
    )(x2d)
    return out[0, 0]


def _avg_l2_norm_impl(tensor_bsd: jax.Array) -> jax.Array:
    d = tensor_bsd.shape[-1]
    return _mean_row_norm(tensor_bsd.reshape(-1, d))


@jax.custom_vjp
def avg_l2_norm(tensor_bsd: jax.Array) -> jax.Array:
    """torch.norm(tensor, p=2, dim=-1).mean() as a Pallas kernel (f32 scalar)."""
    return _avg_l2_norm_impl(tensor_bsd)


def _avg_l2_norm_fwd(tensor_bsd):
    return _avg_l2_norm_impl(tensor_bsd), tensor_bsd


def _avg_l2_norm_bwd(tensor_bsd, g):
    # d/dx mean_rows ||row||_2  =  x / (||row|| * n_rows), with eps guard at 0.
    x = tensor_bsd.astype(jnp.float32)
    norms = jnp.sqrt(jnp.sum(x * x, axis=-1, keepdims=True))
    n_rows = math.prod(tensor_bsd.shape[:-1])
    grad = (g / n_rows) * x / jnp.maximum(norms, 1e-12)
    return (grad.astype(tensor_bsd.dtype),)


avg_l2_norm.defvjp(_avg_l2_norm_fwd, _avg_l2_norm_bwd)


def prompt_embed_loss(tensor_bsd: jax.Array,
                      initial_l2: jax.Array,
                      regularizer: float) -> jax.Array:
    """((avg_l2_norm(x) - initial_l2) / regularizer)^2 ; differentiable w.r.t. x."""
    avg = avg_l2_norm(tensor_bsd)
    diff = (avg - jnp.asarray(initial_l2, jnp.float32)) / regularizer
    return diff * diff


class PromptEmbed:
    """JAX/Pallas port of remucs.model.unet.PromptEmbed."""

    def __init__(self, tensor: jax.Array, regularizer: float = 3.0):
        self.tensor = tensor                                   # nn.Parameter equivalent
        self.regularizer = float(regularizer)
        # .detach() equivalent: stop_gradient of the init-time norm.
        self.initial_l2 = jax.lax.stop_gradient(avg_l2_norm(tensor))

    def get_norm(self) -> jax.Array:
        return avg_l2_norm(self.tensor)

    def forward(self):
        loss = prompt_embed_loss(self.tensor, self.initial_l2, self.regularizer)
        # PyTorch returns self.tensor.data (raw values, no grad) and the scalar loss.
        return jax.lax.stop_gradient(self.tensor), loss


# ---------------------------------------------------------------------------
# Demo / self-check
# ---------------------------------------------------------------------------
if __name__ == "__main__":
    def ref_norm(t):
        return jnp.mean(jnp.sqrt(jnp.sum(t.astype(jnp.float32) ** 2, axis=-1)))

    # --- module-scale forward (B, S, D) like the PyTorch spec ----------------
    key = jax.random.PRNGKey(0)
    B, S, D = 2, 8, 32
    tensor = jax.random.normal(key, (B, S, D), dtype=jnp.float32)

    pe = PromptEmbed(tensor, regularizer=3.0)
    out_tensor, loss0 = pe.forward()
    jax.block_until_ready((out_tensor, loss0))

    pe.tensor = tensor * 1.5                      # simulate a training update
    out_tensor2, loss1 = pe.forward()
    jax.block_until_ready((out_tensor2, loss1))

    init_ref = ref_norm(tensor)
    ref_loss0 = ((ref_norm(tensor) - init_ref) / 3.0) ** 2
    ref_loss1 = ((ref_norm(tensor * 1.5) - init_ref) / 3.0) ** 2

    assert out_tensor.shape == (B, S, D) and out_tensor.dtype == jnp.float32
    assert jnp.allclose(out_tensor, tensor)
    assert jnp.allclose(loss0, ref_loss0, atol=1e-6), (loss0, ref_loss0)
    assert jnp.allclose(loss1, ref_loss1, atol=1e-5), (loss1, ref_loss1)

    # --- gradient through the regularizer loss (custom_vjp) ------------------
    g_kernel = jax.grad(lambda t: prompt_embed_loss(t, pe.initial_l2, 3.0))(tensor * 1.5)
    g_ref = jax.grad(lambda t: ((ref_norm(t) - init_ref) / 3.0) ** 2)(tensor * 1.5)
    jax.block_until_ready((g_kernel, g_ref))
    assert jnp.allclose(g_kernel, g_ref, rtol=1e-4, atol=1e-6), "grad mismatch"

    # --- multi-tile grid + ragged-tail masking path ---------------------------
    xg = jax.random.normal(jax.random.PRNGKey(2), (640, 256), dtype=jnp.float32)
    got = _mean_row_norm(xg, max_tile_rows=256)    # grid=3, last tile half-masked
    want = jnp.mean(jnp.sqrt(jnp.sum(xg * xg, axis=-1)))
    jax.block_until_ready((got, want))
    assert jnp.allclose(got, want, rtol=1e-5, atol=1e-5), (got, want)

    # --- bf16 parameter path (native-dtype DMA, in-kernel upcast) -------------
    xb = jax.random.normal(jax.random.PRNGKey(3), (2, 200, 128), dtype=jnp.bfloat16)
    got_b = avg_l2_norm(xb)
    want_b = ref_norm(xb)
    jax.block_until_ready((got_b, want_b))
    assert jnp.allclose(got_b, want_b, rtol=2e-3, atol=1e-3), (got_b, want_b)

    print("KERNEL_OK")
</pallas_src>

<mosaic_0001>
module attributes {stable_mosaic.version = 11 : i64} {
  func.func @_mean_row_norm_kernel(%arg0: i32, %arg1: memref<16x32xf32, #tpu.memory_space<vmem>>, %arg2: memref<1x1xf32, #tpu.memory_space<vmem>>) attributes {dimension_semantics = [#tpu.dimension_semantics<arbitrary>], iteration_bounds = array<i64: 1>, scalar_prefetch = 0 : i64, scratch_operands = 0 : i64, tpu.core_type = #tpu.core_type<tc>, window_params = [{transform_indices = @transform_0, window_bounds = array<i64: 16, 32>}, {pipeline_mode = #tpu.pipeline_mode<synchronous>, transform_indices = @transform_1, window_bounds = array<i64: 1, 1>}]} {
    %c0_i32 = arith.constant 0 : i32
    %0 = arith.cmpi eq, %arg0, %c0_i32 : i32
    %1 = arith.extui %0 : i1 to i32
    %c0_i32_0 = arith.constant 0 : i32
    %2 = arith.cmpi ne, %1, %c0_i32_0 : i32
    scf.if %2 {
      %cst_11 = arith.constant 0.000000e+00 : f32
      %27 = vector.broadcast %cst_11 : f32 to vector<1x1xf32>
      %c0_12 = arith.constant 0 : index
      %c0_13 = arith.constant 0 : index
      %28 = vector.load %arg2[%c0_12, %c0_13] : memref<1x1xf32, #tpu.memory_space<vmem>>, vector<1x1xf32>
      tpu.vector_store %arg2[%c0_12, %c0_13], %27 {strides = array<i32>} : memref<1x1xf32, #tpu.memory_space<vmem>>, vector<1x1xf32>,
    } else {
    }
    %c0 = arith.constant 0 : index
    %c0_1 = arith.constant 0 : index
    %3 = vector.load %arg1[%c0, %c0_1] : memref<16x32xf32, #tpu.memory_space<vmem>>, vector<16x32xf32>
    %4 = arith.mulf %3, %3 : vector<16x32xf32>
    %cst = arith.constant dense<0.000000e+00> : vector<16xf32>
    %5 = vector.multi_reduction <add>, %4, %cst [1] : vector<16x32xf32> to vector<16xf32>
    %6 = vector.shape_cast %5 : vector<16xf32> to vector<16x1xf32>
    %7 = math.sqrt %6 : vector<16x1xf32>
    %c16_i32 = arith.constant 16 : i32
    %8 = arith.muli %arg0, %c16_i32 : i32
    %9 = tpu.iota {dimensions = array<i32: 0>} : vector<16x1xi32>
    %10 = vector.broadcast %8 : i32 to vector<16x1xi32>
    %11 = arith.addi %10, %9 : vector<16x1xi32>
    %c16_i32_2 = arith.constant 16 : i32
    %12 = vector.broadcast %c16_i32_2 : i32 to vector<16x1xi32>
    %13 = arith.cmpi slt, %11, %12 : vector<16x1xi32>
    %cst_3 = arith.constant 0.000000e+00 : f32
    %14 = vector.broadcast %cst_3 : f32 to vector<16x1xf32>
    %15 = arith.select %13, %7, %14 : vector<16x1xi1>, vector<16x1xf32>
    %c0_4 = arith.constant 0 : index
    %c0_5 = arith.constant 0 : index
    %16 = vector.load %arg2[%c0_4, %c0_5] : memref<1x1xf32, #tpu.memory_space<vmem>>, vector<1x1xf32>
    %17 = vector.shape_cast %15 : vector<16x1xf32> to vector<1x16x1xf32>
    %cst_6 = arith.constant dense<0.000000e+00> : vector<1xf32>
    %18 = vector.multi_reduction <add>, %17, %cst_6 [1, 2] : vector<1x16x1xf32> to vector<1xf32>
    %19 = vector.shape_cast %18 : vector<1xf32> to vector<1x1x1xf32>
    %20 = vector.extract %19[0, 0, 0] : f32 from vector<1x1x1xf32>
    %21 = vector.broadcast %20 : f32 to vector<1x1xf32>
    %22 = arith.addf %16, %21 : vector<1x1xf32>
    %c0_7 = arith.constant 0 : index
    %c0_8 = arith.constant 0 : index
    %23 = vector.load %arg2[%c0_7, %c0_8] : memref<1x1xf32, #tpu.memory_space<vmem>>, vector<1x1xf32>
    tpu.vector_store %arg2[%c0_7, %c0_8], %22 {strides = array<i32>} : memref<1x1xf32, #tpu.memory_space<vmem>>, vector<1x1xf32>,
    %c0_i32_9 = arith.constant 0 : i32
    %24 = arith.cmpi eq, %arg0, %c0_i32_9 : i32
    %25 = arith.extui %24 : i1 to i32
    %c0_i32_10 = arith.constant 0 : i32
    %26 = arith.cmpi ne, %25, %c0_i32_10 : i32
    scf.if %26 {
      %c0_11 = arith.constant 0 : index
      %c0_12 = arith.constant 0 : index
      %27 = vector.load %arg2[%c0_11, %c0_12] : memref<1x1xf32, #tpu.memory_space<vmem>>, vector<1x1xf32>
      %cst_13 = arith.constant 6.250000e-02 : f32
      %28 = vector.broadcast %cst_13 : f32 to vector<1x1xf32>
      %29 = arith.mulf %27, %28 : vector<1x1xf32>
      %c0_14 = arith.constant 0 : index
      %c0_15 = arith.constant 0 : index
      %30 = vector.load %arg2[%c0_14, %c0_15] : memref<1x1xf32, #tpu.memory_space<vmem>>, vector<1x1xf32>
      tpu.vector_store %arg2[%c0_14, %c0_15], %29 {strides = array<i32>} : memref<1x1xf32, #tpu.memory_space<vmem>>, vector<1x1xf32>,
    } else {
    }
    return
  }
  func.func @transform_0(%arg0: i32) -> (i32, i32) {
    %c0_i32 = arith.constant 0 : i32
    %c0_i32_0 = arith.constant 0 : i32
    return %arg0, %c0_i32 : i32, i32
  }
  func.func @transform_1(%arg0: i32) -> (i32, i32) {
    %c0_i32 = arith.constant 0 : i32
    %c0_i32_0 = arith.constant 0 : i32
    %c0_i32_1 = arith.constant 0 : i32
    return %c0_i32, %c0_i32_0 : i32, i32
  }
}

</mosaic_0001>

<llo_original>
// kernel: tpu_custom_call.1
$region0: #{tpu_custom_call.1}
  #allocation0 [shape = 'u32[]', space=smem, size = 0x4, offset = 0x4, fixed_abs, tag = 'smem constant byte address 0x4 - core index']
  #allocation1 [shape = 'u32[144,128]{1,0:T(1,128)}', space=vmem, size = 0x12000, scoped, tag = 'internal scratch']
  %s0 = inlined_call_operand.hbm [shape: f32[16,32], index: 0, kind: input, shape index: {}]
  %s1 = inlined_call_operand.hbm [shape: f32[1,1], index: 1, kind: output, shape index: {}]
  %s2 = sld [smem:[#allocation0]]
  $region26: #{tpu_custom_call.1} parent=0
    _
  %s4 = ssub.s32 1, %s2
  %s5 = scalar_select 0, %s4, %s2
  $region1: #{tpu_custom_call.1} parent=0
    #allocation2 [shape = 'u8[8192]{0}', space=vmem, size = 0x2000, scoped, tag = 'input window, operand 0, single buffered']
    #allocation3 [shape = 's32[1]{0}', space=sflag, size = 0x4, scoped, tag = 'scoped memory for tpu_custom_call.1']
    #allocation4 [shape = 's32[1]{0}', space=sflag, size = 0x4, scoped, tag = 'scoped memory for tpu_custom_call.1']
    #allocation5 [shape = 'u8[512]{0}', space=vmem, size = 0x400, scoped, tag = 'output window, operand 0, single buffered']
    %6 = vsyncpa [#allocation3], 0
    %7 = vsyncpa [#allocation4], 0
    // Predicated region
    $region2: #{tpu_custom_call.1} parent=1 // pred_check
      _
    $region3: #{tpu_custom_call.1} parent=1 // pred_check_branch
      %9 = sbr.rel (0) target = $region5
    $region4: #{tpu_custom_call.1} parent=1 // pred_region
      %s11 = ssub.s32 256, 256
      %12 = vsyncadd [#allocation3], %s11
      %s13 = sshll.u32 [#allocation2], 4
      %s14 = int_to_ptr.vmem [resolvable:$true] %s13
      %19 = dma.hbm_to_vmem [thread:$0]  %s0, 256, %s14, [#allocation3], 128, 128, 8
    $region5: #{tpu_custom_call.1} parent=1 // pred_fallthru
      _
    // Predicated region
    $region6: #{tpu_custom_call.1} parent=1 // pred_check
      _
    $region7: #{tpu_custom_call.1} parent=1 // pred_check_branch
      %21 = sbr.rel (0) target = $region9
    $region8: #{tpu_custom_call.1} parent=1 // pred_region
      %22 = dma.done [#allocation3], 256
    $region9: #{tpu_custom_call.1} parent=1 // pred_fallthru
      _
    %p23 = scmp.eq.s32.totalorder 0, 0
    // Predicated region
    $region10: #{tpu_custom_call.1} parent=1 // pred_check
      %p24 = pneg %p23
    $region11: #{tpu_custom_call.1} parent=1 // pred_check_branch
      %26 = sbr.rel (%p24) target = $region13
    $region12: #{tpu_custom_call.1} parent=1 // pred_region
      %vm27 = vcmask 0
      %28 = vst.msk [vmem:[#allocation5] sm:$0x1] %vm27, 0.0
    $region13: #{tpu_custom_call.1} parent=1 // pred_fallthru
      _
    %v29 = vld [vmem:[#allocation2] sm:$0xff]
    %v30 = vld [vmem:[#allocation2 + $0x8] sm:$0xff]
    %v31 = vmul.f32 %v29, %v29
    %v32 = vmul.f32 %v30, %v30
    %vm33 = vcmask 261120
    %v34 = vsel %vm33, %v31, 0.0
    %35 = vadd.xlane.f32.xlu0 %v34
    %v36 = vpop.xlane.xlu0 %35
    %v37 = vsel %vm33, %v32, 0.0
    %38 = vadd.xlane.f32.xlu0 %v37
    %v39 = vpop.xlane.xlu0 %38
    %v40 = vrsqrt.pop %v36
    %v41 = vmul.f32 %v36, %v40
    %vm42 = vcmp.eq.f32.partialorder %v36, inf
    %v43 = vsel %vm42, %v36, %v41
    %vm44 = vcmp.eq.f32.partialorder %v36, 0.0
    %v45 = vand.u32 %v36, 2147483648
    %v46 = vsel %vm44, %v45, %v43
    %v47 = vrsqrt.pop %v39
    %v48 = vmul.f32 %v39, %v47
    %vm49 = vcmp.eq.f32.partialorder %v39, inf
    %v50 = vsel %vm49, %v39, %v48
    %vm51 = vcmp.eq.f32.partialorder %v39, 0.0
    %v52 = vand.u32 %v39, 2147483648
    %v53 = vsel %vm51, %v52, %v50
    %s54 = smul.u32 0, 16
    %v55 = vlaneseq
    %v56 = vshrl.u32 %v55, 7
    %v57 = vadd.s32 %v56, 8
    %v58 = vstv %s54
    %v59 = vadd.s32 %v58, %v56
    %v60 = vadd.s32 %v58, %v57
    %vm61 = vcmp.lt.s32.totalorder %v59, 16
    %vm62 = vcmp.lt.s32.totalorder %v60, 16
    %v63 = vsel %vm61, %v46, 0.0
    %v64 = vsel %vm62, %v53, 0.0
    %v65 = vld [vmem:[#allocation5] sm:$0x1]
    %vm66 = vcmask 7168
    %v67 = vsel %vm66, %v63, 0.0
    %v68 = vsel %vm66, %v64, 0.0
    %v69 = vadd.f32 %v67, %v68
    %70 = vadd.xlane.f32.xlu0 %v69
    %v71 = vpop.xlane.xlu0 %70
    %v72 = vrot.slane %v71, 4
    %v73 = vadd.f32 %v71, %v72
    %v74 = vrot.slane %v73, 2
    %v75 = vadd.f32 %v73, %v74
    %v76 = vrot.slane %v75, 1
    %v77 = vadd.f32 %v75, %v76
    %s78 = vtos %v77
    %v79 = vstv %s78
    %v80 = vadd.f32 %v65, %v79
    %vm81 = vcmask 0
    %82 = vst.msk [vmem:[#allocation5] sm:$0x1] %vm81, %v80
    // Predicated region
    $region14: #{tpu_custom_call.1} parent=1 // pred_check
      %p83 = pneg %p23
    $region15: #{tpu_custom_call.1} parent=1 // pred_check_branch
      %85 = sbr.rel (%p83) target = $region17
    $region16: #{tpu_custom_call.1} parent=1 // pred_region
      %v86 = vld [vmem:[#allocation5] sm:$0x1]
      %v87 = vmul.f32 %v86, 0.0625
      %88 = vst.msk [vmem:[#allocation5] sm:$0x1] %vm81, %v87
    $region17: #{tpu_custom_call.1} parent=1 // pred_fallthru
      _
    // Predicated region
    $region18: #{tpu_custom_call.1} parent=1 // pred_check
      _
    $region19: #{tpu_custom_call.1} parent=1 // pred_check_branch
      %90 = sbr.rel (0) target = $region21
    $region20: #{tpu_custom_call.1} parent=1 // pred_region
      %s92 = ssub.s32 16, 16
      %93 = vsyncadd [#allocation4], %s92
      %s95 = sshll.u32 [#allocation5], 4
      %s96 = int_to_ptr.vmem [resolvable:$true] %s95
      %98 = dma.vmem_to_hbm [thread:$0]  %s96, 16, %s1, [#allocation4]
    $region21: #{tpu_custom_call.1} parent=1 // pred_fallthru
      _
    // Predicated region
    $region22: #{tpu_custom_call.1} parent=1 // pred_check
      _
    $region23: #{tpu_custom_call.1} parent=1 // pred_check_branch
      %100 = sbr.rel (0) target = $region25
    $region24: #{tpu_custom_call.1} parent=1 // pred_region
      %101 = dma.done [#allocation4], 16
    $region25: #{tpu_custom_call.1} parent=1 // pred_fallthru
      _
    %102 = vsyncpa [#allocation3], 1
    %103 = vsyncpa [#allocation4], 1

</llo_original>
